<compile_context>
chip_gen: v5e
topology: v5e:2x2
jax: 0.10.0
libtpu: 0.0.40
codegen_flags: <defaults>
</compile_context>

<pallas_src>
import jax
import jax.numpy as jnp
from jax import lax
from jax.experimental import pallas as pl
from jax.experimental.pallas import tpu as pltpu


def _round_up(x, m):
    return (x + m - 1) // m * m


def _select_tile_b(batch, requested):
    """Batch-tile: sublane-aligned, lane-dense (x128) for big batches, and
    capped so big batches keep >= 2 grid steps (v7x megacore sharding)."""
    b8 = _round_up(batch, 8)
    if b8 <= 256:
        return b8                                  # single small tile
    tile = _round_up(min(requested, b8), 128)      # lane-dense multiple of 128
    half = _round_up((b8 + 1) // 2, 128)           # keep >= 2 grid steps
    return max(128, min(tile, half))


def mlp_kernel(x_ref, w1_ref, b1_ref, w2_ref, b2_ref, w3_ref, o_ref):
    # Layer 1: h1 = relu(x @ W1 + b1); x is the pre-packed [u | i] tile, so the
    # PyTorch concat never materializes separately and K = 2E on the MXU.
    h1 = jnp.dot(x_ref[...], w1_ref[...], preferred_element_type=jnp.float32)
    h1 = jnp.maximum(h1 + b1_ref[...], 0.0)          # f32 epilogue (v5e-safe)

    # Layer 2: h2 = relu(h1 @ W2 + b2).  NOTE (documented): in the bf16 path
    # the f32 h1 accumulator is re-quantized to bf16 here, adding one rounding
    # step beyond just casting the original inputs (covered by loose tol).
    h2 = jnp.dot(h1.astype(w2_ref.dtype), w2_ref[...],
                 preferred_element_type=jnp.float32)
    h2 = jnp.maximum(h2 + b2_ref[...], 0.0)

    # Layer 3 (no bias, out_features=1): contract (1, E2) with (tile_b, E2) on
    # the E2 axis -> (1, tile_b).  Output row is lane-dense (batch on lanes).
    o = lax.dot_general(w3_ref[...], h2, (((1,), (1,)), ((), ())),
                        preferred_element_type=jnp.float32)
    o_ref[...] = o.reshape(o_ref.shape)


def prepare_params(params, compute_dtype=jnp.bfloat16):
    """One-time prep: pre-cast embedding tables + matmul weights to the compute
    dtype (halves gather HBM traffic for bf16), keep biases / final projection
    in f32 for the f32 epilogues, and pre-reshape w3 into a row vector."""
    E2 = params["w2"].shape[1]
    return {
        "user_emb": params["user_emb"].astype(compute_dtype),
        "item_emb": params["item_emb"].astype(compute_dtype),
        "w1": params["w1"].astype(compute_dtype),               # (2E, E)
        "b1": params["b1"].astype(jnp.float32),                 # (1, E)
        "w2": params["w2"].astype(compute_dtype),               # (E, E2)
        "b2": params["b2"].astype(jnp.float32),                 # (1, E2)
        "w3": params["w3"].reshape(1, E2).astype(jnp.float32),  # (1, E2)
    }


def mlp_forward(user_index, item_index, prepared, *, tile_b=2048):
    """Full MLP-model forward.  Embedding gather in XLA, MLP in Pallas.
    `prepared` must come from prepare_params()."""
    E, E2 = prepared["w2"].shape
    B = user_index.shape[0]
    act_dtype = prepared["user_emb"].dtype
    itemsize = jnp.dtype(act_dtype).itemsize

    tile = _select_tile_b(B, tile_b)
    padded_b = _round_up(B, tile)
    num_tiles = padded_b // tile
    pad = padded_b - B
    if pad:
        # Padded rows gather (valid) row 0; their outputs are sliced off below.
        user_index = jnp.pad(user_index, (0, pad))
        item_index = jnp.pad(item_index, (0, pad))

    # Packed activation stream x = [u | i]: one (padded_b, 2E) buffer.
    x = jnp.concatenate([prepared["user_emb"][user_index],
                         prepared["item_emb"][item_index]], axis=-1)

    flops = 2 * padded_b * (2 * E * E + E * E2 + E2)
    bytes_accessed = (padded_b * 2 * E * itemsize            # x
                      + (2 * E * E + E * E2) * itemsize      # W1, W2
                      + (E + 2 * E2) * 4                     # b1, b2, w3
                      + padded_b * 4)                        # output
    cost = pl.CostEstimate(flops=flops, transcendentals=0,
                           bytes_accessed=bytes_accessed)

    # Weights/biases: constant index_map, fetched once, single-buffered.
    def resident(shape):
        return pl.BlockSpec(shape, lambda b: (0, 0),
                            pipeline_mode=pl.Buffered(1))

    compiler_kwargs = dict(dimension_semantics=("parallel",))
    # Double-buffered x + out, plus resident weights; raise the scoped-VMEM
    # limit only when an aggressive tile would exceed v5e's 16 MiB default.
    vmem_need = (2 * tile * (2 * E * itemsize + 4)
                 + (2 * E * E + E * E2) * itemsize + (E + 2 * E2) * 4)
    if vmem_need > 12 * 1024 * 1024:
        compiler_kwargs["vmem_limit_bytes"] = min(2 * vmem_need,
                                                  100 * 1024 * 1024)

    out = pl.pallas_call(
        mlp_kernel,
        out_shape=jax.ShapeDtypeStruct((num_tiles, 1, tile), jnp.float32),
        grid=(num_tiles,),
        in_specs=[
            pl.BlockSpec((tile, 2 * E), lambda b: (b, 0)),   # x (batch-tiled)
            resident((2 * E, E)),                            # W1
            resident((1, E)),                                # b1
            resident((E, E2)),                               # W2
            resident((1, E2)),                               # b2
            resident((1, E2)),                               # w3 (as a row)
        ],
        out_specs=pl.BlockSpec((1, 1, tile), lambda b: (b, 0, 0)),
        compiler_params=pltpu.CompilerParams(**compiler_kwargs),
        cost_estimate=cost,
    )(x, prepared["w1"], prepared["b1"], prepared["w2"], prepared["b2"],
      prepared["w3"])

    return out.reshape(padded_b)[:B]                         # (B,)


def init_params(key, user_num, item_num, embedding_dim):
    E = embedding_dim
    ks = jax.random.split(key, 7)
    inv1 = 1.0 / jnp.sqrt(2.0 * E)
    inv2 = 1.0 / jnp.sqrt(float(E))
    inv3 = 1.0 / jnp.sqrt(E / 2.0)
    return {
        # nn.Embedding default init: N(0, 1)
        "user_emb": jax.random.normal(ks[0], (user_num, E), jnp.float32),
        "item_emb": jax.random.normal(ks[1], (item_num, E), jnp.float32),
        # Linear weights stored as (in_features, out_features) == W^T
        "w1": jax.random.uniform(ks[2], (2 * E, E), jnp.float32, -inv1, inv1),
        "b1": jax.random.uniform(ks[3], (1, E), jnp.float32, -inv1, inv1),
        "w2": jax.random.uniform(ks[4], (E, E // 2), jnp.float32, -inv2, inv2),
        "b2": jax.random.uniform(ks[5], (1, E // 2), jnp.float32, -inv2, inv2),
        "w3": jax.random.uniform(ks[6], (E // 2, 1), jnp.float32, -inv3, inv3),
    }


def reference_forward(user_index, item_index, params):
    u = params["user_emb"][user_index]
    i = params["item_emb"][item_index]
    x = jnp.concatenate([u, i], axis=-1)
    h1 = jnp.maximum(x @ params["w1"] + params["b1"], 0.0)
    h2 = jnp.maximum(h1 @ params["w2"] + params["b2"], 0.0)
    return (h2 @ params["w3"]).squeeze(axis=1)


if __name__ == "__main__":
    user_num, item_num, embedding_dim, batch = 100, 200, 32, 8

    key = jax.random.PRNGKey(0)
    k_params, k_u, k_i = jax.random.split(key, 3)
    params = init_params(k_params, user_num, item_num, embedding_dim)

    user_index = jax.random.randint(k_u, (batch,), 0, user_num, dtype=jnp.int32)
    item_index = jax.random.randint(k_i, (batch,), 0, item_num, dtype=jnp.int32)

    ref = reference_forward(user_index, item_index, params)

    # f32 path: bit-level-comparable to the reference.
    prep_f32 = prepare_params(params, jnp.float32)
    fwd_f32 = jax.jit(lambda ui, ii: mlp_forward(ui, ii, prep_f32))
    out_f32 = jax.block_until_ready(fwd_f32(user_index, item_index))
    assert out_f32.shape == (batch,), out_f32.shape
    assert jnp.allclose(out_f32, ref, atol=1e-4, rtol=1e-4), (out_f32, ref)

    # bf16 path (recommended production setting: tables pre-cast once).
    prep_bf16 = prepare_params(params, jnp.bfloat16)
    fwd_bf16 = jax.jit(lambda ui, ii: mlp_forward(ui, ii, prep_bf16))
    out_bf16 = jax.block_until_ready(fwd_bf16(user_index, item_index))
    assert out_bf16.shape == (batch,), out_bf16.shape
    assert jnp.allclose(out_bf16, ref, atol=7.5e-2, rtol=7.5e-2), (out_bf16, ref)

    # Ragged batch (exercises padding up to the batch tile).
    out_rag = jax.block_until_ready(
        mlp_forward(user_index[:5], item_index[:5], prep_f32))
    assert out_rag.shape == (5,), out_rag.shape
    assert jnp.allclose(out_rag, ref[:5], atol=1e-4, rtol=1e-4), (out_rag, ref[:5])

    # Larger batch: exercises the multi-step grid (>= 2 tiles, v7x-friendly).
    big = 384
    k_u2, k_i2 = jax.random.split(jax.random.PRNGKey(1))
    ui_big = jax.random.randint(k_u2, (big,), 0, user_num, dtype=jnp.int32)
    ii_big = jax.random.randint(k_i2, (big,), 0, item_num, dtype=jnp.int32)
    ref_big = reference_forward(ui_big, ii_big, params)
    out_big = jax.block_until_ready(
        jax.jit(lambda ui, ii: mlp_forward(ui, ii, prep_f32))(ui_big, ii_big))
    assert out_big.shape == (big,), out_big.shape
    assert jnp.allclose(out_big, ref_big, atol=1e-4, rtol=1e-4)

    print("KERNEL_OK")
</pallas_src>

<mosaic_0001>
module attributes {stable_mosaic.version = 11 : i64} {
  func.func @mlp_kernel(%arg0: i32, %arg1: memref<8x64xf32, #tpu.memory_space<vmem>>, %arg2: memref<64x32xf32, #tpu.memory_space<vmem>>, %arg3: memref<1x32xf32, #tpu.memory_space<vmem>>, %arg4: memref<32x16xf32, #tpu.memory_space<vmem>>, %arg5: memref<1x16xf32, #tpu.memory_space<vmem>>, %arg6: memref<1x16xf32, #tpu.memory_space<vmem>>, %arg7: memref<1x1x8xf32, #tpu.memory_space<vmem>>) attributes {dimension_semantics = [#tpu.dimension_semantics<parallel>], iteration_bounds = array<i64: 1>, scalar_prefetch = 0 : i64, scratch_operands = 0 : i64, tpu.core_type = #tpu.core_type<tc>, window_params = [{transform_indices = @transform_0, window_bounds = array<i64: 8, 64>}, {pipeline_mode = #tpu.pipeline_mode<synchronous>, transform_indices = @transform_1, window_bounds = array<i64: 64, 32>}, {pipeline_mode = #tpu.pipeline_mode<synchronous>, transform_indices = @transform_2, window_bounds = array<i64: 1, 32>}, {pipeline_mode = #tpu.pipeline_mode<synchronous>, transform_indices = @transform_3, window_bounds = array<i64: 32, 16>}, {pipeline_mode = #tpu.pipeline_mode<synchronous>, transform_indices = @transform_4, window_bounds = array<i64: 1, 16>}, {pipeline_mode = #tpu.pipeline_mode<synchronous>, transform_indices = @transform_5, window_bounds = array<i64: 1, 16>}, {transform_indices = @transform_6, window_bounds = array<i64: 1, 1, 8>}]} {
    %c0 = arith.constant 0 : index
    %c0_0 = arith.constant 0 : index
    %0 = vector.load %arg1[%c0, %c0_0] : memref<8x64xf32, #tpu.memory_space<vmem>>, vector<8x64xf32>
    %c0_1 = arith.constant 0 : index
    %c0_2 = arith.constant 0 : index
    %1 = vector.load %arg2[%c0_1, %c0_2] : memref<64x32xf32, #tpu.memory_space<vmem>>, vector<64x32xf32>
    %cst = arith.constant dense<0.000000e+00> : vector<8x32xf32>
    %2 = tpu.matmul %0, %1, %cst {dimension_numbers = #tpu.dot_dimension_numbers<[1], [0], [0], [1], [0, 0, 1, 1], [], []>} : vector<8x64xf32>, vector<64x32xf32>, vector<8x32xf32> -> vector<8x32xf32>
    %c0_3 = arith.constant 0 : index
    %c0_4 = arith.constant 0 : index
    %3 = vector.load %arg3[%c0_3, %c0_4] : memref<1x32xf32, #tpu.memory_space<vmem>>, vector<1x32xf32>
    %4 = vector.broadcast %3 : vector<1x32xf32> to vector<8x32xf32>
    %5 = arith.addf %2, %4 : vector<8x32xf32>
    %cst_5 = arith.constant 0.000000e+00 : f32
    %6 = vector.broadcast %cst_5 : f32 to vector<8x32xf32>
    %7 = arith.maximumf %5, %6 : vector<8x32xf32>
    %c0_6 = arith.constant 0 : index
    %c0_7 = arith.constant 0 : index
    %8 = vector.load %arg4[%c0_6, %c0_7] : memref<32x16xf32, #tpu.memory_space<vmem>>, vector<32x16xf32>
    %cst_8 = arith.constant dense<0.000000e+00> : vector<8x16xf32>
    %9 = tpu.matmul %7, %8, %cst_8 {dimension_numbers = #tpu.dot_dimension_numbers<[1], [0], [0], [1], [0, 0, 1, 1], [], []>} : vector<8x32xf32>, vector<32x16xf32>, vector<8x16xf32> -> vector<8x16xf32>
    %c0_9 = arith.constant 0 : index
    %c0_10 = arith.constant 0 : index
    %10 = vector.load %arg5[%c0_9, %c0_10] : memref<1x16xf32, #tpu.memory_space<vmem>>, vector<1x16xf32>
    %11 = vector.broadcast %10 : vector<1x16xf32> to vector<8x16xf32>
    %12 = arith.addf %9, %11 : vector<8x16xf32>
    %cst_11 = arith.constant 0.000000e+00 : f32
    %13 = vector.broadcast %cst_11 : f32 to vector<8x16xf32>
    %14 = arith.maximumf %12, %13 : vector<8x16xf32>
    %c0_12 = arith.constant 0 : index
    %c0_13 = arith.constant 0 : index
    %15 = vector.load %arg6[%c0_12, %c0_13] : memref<1x16xf32, #tpu.memory_space<vmem>>, vector<1x16xf32>
    %cst_14 = arith.constant dense<0.000000e+00> : vector<1x8xf32>
    %16 = tpu.matmul %15, %14, %cst_14 {dimension_numbers = #tpu.dot_dimension_numbers<[1], [1], [0], [0], [0, 0, 1, 0], [], []>} : vector<1x16xf32>, vector<8x16xf32>, vector<1x8xf32> -> vector<1x8xf32>
    %17 = vector.shape_cast %16 : vector<1x8xf32> to vector<1x1x8xf32>
    %c0_15 = arith.constant 0 : index
    %c0_16 = arith.constant 0 : index
    %c0_17 = arith.constant 0 : index
    %18 = vector.load %arg7[%c0_15, %c0_16, %c0_17] : memref<1x1x8xf32, #tpu.memory_space<vmem>>, vector<1x1x8xf32>
    tpu.vector_store %arg7[%c0_15, %c0_16, %c0_17], %17 {strides = array<i32>} : memref<1x1x8xf32, #tpu.memory_space<vmem>>, vector<1x1x8xf32>,
    return
  }
  func.func @transform_0(%arg0: i32) -> (i32, i32) {
    %c0_i32 = arith.constant 0 : i32
    %c0_i32_0 = arith.constant 0 : i32
    return %arg0, %c0_i32 : i32, i32
  }
  func.func @transform_1(%arg0: i32) -> (i32, i32) {
    %c0_i32 = arith.constant 0 : i32
    %c0_i32_0 = arith.constant 0 : i32
    %c0_i32_1 = arith.constant 0 : i32
    return %c0_i32, %c0_i32_0 : i32, i32
  }
  func.func @transform_2(%arg0: i32) -> (i32, i32) {
    %c0_i32 = arith.constant 0 : i32
    %c0_i32_0 = arith.constant 0 : i32
    %c0_i32_1 = arith.constant 0 : i32
    return %c0_i32, %c0_i32_0 : i32, i32
  }
  func.func @transform_3(%arg0: i32) -> (i32, i32) {
    %c0_i32 = arith.constant 0 : i32
    %c0_i32_0 = arith.constant 0 : i32
    %c0_i32_1 = arith.constant 0 : i32
    return %c0_i32, %c0_i32_0 : i32, i32
  }
  func.func @transform_4(%arg0: i32) -> (i32, i32) {
    %c0_i32 = arith.constant 0 : i32
    %c0_i32_0 = arith.constant 0 : i32
    %c0_i32_1 = arith.constant 0 : i32
    return %c0_i32, %c0_i32_0 : i32, i32
  }
  func.func @transform_5(%arg0: i32) -> (i32, i32) {
    %c0_i32 = arith.constant 0 : i32
    %c0_i32_0 = arith.constant 0 : i32
    %c0_i32_1 = arith.constant 0 : i32
    return %c0_i32, %c0_i32_0 : i32, i32
  }
  func.func @transform_6(%arg0: i32) -> (i32, i32, i32) {
    %c0_i32 = arith.constant 0 : i32
    %c0_i32_0 = arith.constant 0 : i32
    %c0_i32_1 = arith.constant 0 : i32
    return %arg0, %c0_i32, %c0_i32_0 : i32, i32, i32
  }
}

</mosaic_0001>

<llo_original>
// kernel: _lambda_.1
$region0: #{_lambda_.1}
  #allocation0 [shape = 'u32[]', space=smem, size = 0x4, offset = 0x4, fixed_abs, tag = 'smem constant byte address 0x4 - core index']
  #allocation1 [shape = 'u32[72,128]{1,0:T(1,128)}', space=vmem, size = 0x9000, scoped, tag = 'internal scratch']
  %s0 = inlined_call_operand.vmem [shape: f32[8,64], index: 0, kind: input, shape index: {}]
  %s1 = inlined_call_operand.vmem [shape: f32[64,32], index: 1, kind: input, shape index: {}]
  %s2 = inlined_call_operand.vmem [shape: f32[1,32], index: 2, kind: input, shape index: {}]
  %s3 = inlined_call_operand.vmem [shape: f32[32,16], index: 3, kind: input, shape index: {}]
  %s4 = inlined_call_operand.vmem [shape: f32[1,16], index: 4, kind: input, shape index: {}]
  %s5 = inlined_call_operand.vmem [shape: f32[1,16], index: 5, kind: input, shape index: {}]
  %s6 = inlined_call_operand.hbm [shape: f32[1,1,8], index: 6, kind: output, shape index: {}]
  %s7 = sld [smem:[#allocation0]]
  $region34: #{_lambda_.1} parent=0
    _
  %s9 = ssub.s32 1, %s7
  %s10 = scalar_select 0, %s9, %s7
  $region1: #{_lambda_.1} parent=0
    #allocation2 [shape = 'u8[512]{0}', space=vmem, size = 0x400, scoped, tag = 'output window, operand 0, single buffered']
    #allocation3 [shape = 's32[1]{0}', space=sflag, size = 0x4, scoped, tag = 'scoped memory for _lambda_.1']
    %11 = vsyncpa [#allocation3], 0
    // Predicated region
    $region2: #{_lambda_.1} parent=1 // pred_check
      _
    $region3: #{_lambda_.1} parent=1 // pred_check_branch
      %13 = sbr.rel (0) target = $region5
    $region4: #{_lambda_.1} parent=1 // pred_region
      _
    $region5: #{_lambda_.1} parent=1 // pred_fallthru
      _
    // Predicated region
    $region6: #{_lambda_.1} parent=1 // pred_check
      _
    $region7: #{_lambda_.1} parent=1 // pred_check_branch
      %15 = sbr.rel (0) target = $region9
    $region8: #{_lambda_.1} parent=1 // pred_region
      _
    $region9: #{_lambda_.1} parent=1 // pred_fallthru
      _
    // Predicated region
    $region10: #{_lambda_.1} parent=1 // pred_check
      _
    $region11: #{_lambda_.1} parent=1 // pred_check_branch
      %17 = sbr.rel (0) target = $region13
    $region12: #{_lambda_.1} parent=1 // pred_region
      _
    $region13: #{_lambda_.1} parent=1 // pred_fallthru
      _
    // Predicated region
    $region14: #{_lambda_.1} parent=1 // pred_check
      _
    $region15: #{_lambda_.1} parent=1 // pred_check_branch
      %19 = sbr.rel (0) target = $region17
    $region16: #{_lambda_.1} parent=1 // pred_region
      _
    $region17: #{_lambda_.1} parent=1 // pred_fallthru
      _
    // Predicated region
    $region18: #{_lambda_.1} parent=1 // pred_check
      _
    $region19: #{_lambda_.1} parent=1 // pred_check_branch
      %21 = sbr.rel (0) target = $region21
    $region20: #{_lambda_.1} parent=1 // pred_region
      _
    $region21: #{_lambda_.1} parent=1 // pred_fallthru
      _
    // Predicated region
    $region22: #{_lambda_.1} parent=1 // pred_check
      _
    $region23: #{_lambda_.1} parent=1 // pred_check_branch
      %23 = sbr.rel (0) target = $region25
    $region24: #{_lambda_.1} parent=1 // pred_region
      _
    $region25: #{_lambda_.1} parent=1 // pred_fallthru
      _
    %v24 = vld [vmem:[%s0] sm:$0xff]
    %v25 = vld [vmem:[%s1] sm:$0xff]
    %v26 = vld [vmem:[%s1 + $0x8] sm:$0xff]
    %v27 = vld [vmem:[%s1 + $0x10] sm:$0xff]
    %v28 = vld [vmem:[%s1 + $0x18] sm:$0xff]
    %v29 = vld [vmem:[%s1 + $0x20] sm:$0xff]
    %v30 = vld [vmem:[%s1 + $0x28] sm:$0xff]
    %v31 = vld [vmem:[%s1 + $0x30] sm:$0xff]
    %v32 = vld [vmem:[%s1 + $0x38] sm:$0xff]
    %v33 = vld [vmem:[%s2] sm:$0x1]
    %v35 = vperm.slane %v33, 0
    %vm37 = vcmask 523264
    %v39 = vsel %vm37, %v24, 0
    %41 = vmatpush.msra.mxu0 0.0
    %42 = vmatpush.msra.mxu0 0.0
    %43 = vmatpush.msra.mxu0 0.0
    %44 = vmatpush.msra.mxu0 0.0
    %45 = vmatpush.msra.mxu0 0.0
    %46 = vmatpush.msra.mxu0 0.0
    %47 = vmatpush.msra.mxu0 0.0
    %48 = vmatpush.msra.mxu0 0.0
    %49 = vmatpush.msra.mxu0 %v32
    %50 = vmatpush.msra.mxu0 %v31
    %51 = vmatpush.msra.mxu0 %v30
    %52 = vmatpush.msra.mxu0 %v29
    %53 = vmatpush.msra.mxu0 %v28
    %54 = vmatpush.msra.mxu0 %v27
    %55 = vmatpush.msra.mxu0 %v26
    %56 = vmatpush.msra.mxu0 %v25
    %57 = vmatmul.f32.gmra.mxu0 %v39
    %v58 = vpop.f32.mrf.mxu0
    %v59 = vadd.f32 %v35, %v58
    %60 = vdwg.mxu0
    %v61 = vmax.f32 %v59, 0.0
    %v62 = vld [vmem:[%s3] sm:$0xff]
    %v63 = vld [vmem:[%s3 + $0x8] sm:$0xff]
    %v64 = vld [vmem:[%s3 + $0x10] sm:$0xff]
    %v65 = vld [vmem:[%s3 + $0x18] sm:$0xff]
    %v66 = vld [vmem:[%s4] sm:$0x1]
    %v68 = vperm.slane %v66, 0
    %vm70 = vcmask 261120
    %v72 = vsel %vm70, %v61, 0
    %74 = vmatpush.msra.mxu0 0.0
    %75 = vmatpush.msra.mxu0 0.0
    %76 = vmatpush.msra.mxu0 0.0
    %77 = vmatpush.msra.mxu0 0.0
    %78 = vmatpush.msra.mxu0 0.0
    %79 = vmatpush.msra.mxu0 0.0
    %80 = vmatpush.msra.mxu0 0.0
    %81 = vmatpush.msra.mxu0 0.0
    %82 = vmatpush.msra.mxu0 0.0
    %83 = vmatpush.msra.mxu0 0.0
    %84 = vmatpush.msra.mxu0 0.0
    %85 = vmatpush.msra.mxu0 0.0
    %86 = vmatpush.msra.mxu0 %v65
    %87 = vmatpush.msra.mxu0 %v64
    %88 = vmatpush.msra.mxu0 %v63
    %89 = vmatpush.msra.mxu0 %v62
    %90 = vmatmul.f32.gmra.mxu0 %v72
    %v91 = vpop.f32.mrf.mxu0
    %v92 = vadd.f32 %v68, %v91
    %93 = vdwg.mxu0
    %v94 = vmax.f32 %v92, 0.0
    %v95 = vld [vmem:[%s5] sm:$0x1]
    %vm96 = vcmask 130048
    %v98 = vsel %vm96, %v95, 0
    %v101 = vsel %vm96, %v94, 0
    %103 = vmatpush.xpose.msra.mxu0 0.0
    %104 = vmatpush.xpose.msra.mxu0 0.0
    %105 = vmatpush.xpose.msra.mxu0 0.0
    %106 = vmatpush.xpose.msra.mxu0 0.0
    %107 = vmatpush.xpose.msra.mxu0 0.0
    %108 = vmatpush.xpose.msra.mxu0 0.0
    %109 = vmatpush.xpose.msra.mxu0 0.0
    %110 = vmatpush.xpose.msra.mxu0 0.0
    %111 = vmatpush.xpose.msra.mxu0 0.0
    %112 = vmatpush.xpose.msra.mxu0 0.0
    %113 = vmatpush.xpose.msra.mxu0 0.0
    %114 = vmatpush.xpose.msra.mxu0 0.0
    %115 = vmatpush.xpose.msra.mxu0 0.0
    %116 = vmatpush.xpose.msra.mxu0 0.0
    %117 = vmatpush.xpose.msra.mxu0 0.0
    %118 = vmatpush.xpose.msra.mxu0 %v101
    %119 = vmatmul.f32.gmra.mxu0 %v98
    %v120 = vpop.f32.mrf.mxu0
    %v121 = vadd.f32 0.0, %v120
    %122 = vdwg.mxu0
    %vm123 = vcmask 57344
    %124 = vst.msk [vmem:[#allocation2] sm:$0x1] %vm123, %v121
    // Predicated region
    $region26: #{_lambda_.1} parent=1 // pred_check
      _
    $region27: #{_lambda_.1} parent=1 // pred_check_branch
      %126 = sbr.rel (0) target = $region29
    $region28: #{_lambda_.1} parent=1 // pred_region
      %128 = vsyncadd [#allocation3], 0
      %s130 = sshll.u32 [#allocation2], 4
      %s131 = int_to_ptr.vmem [resolvable:$true] %s130
      %s132 = sshll.u32 %s6, 4
      %s133 = int_to_ptr.hbm [resolvable:$true] %s132
      %135 = dma.vmem_to_hbm [thread:$0]  %s131, 16, %s133, [#allocation3]
    $region29: #{_lambda_.1} parent=1 // pred_fallthru
      _
    // Predicated region
    $region30: #{_lambda_.1} parent=1 // pred_check
      _
    $region31: #{_lambda_.1} parent=1 // pred_check_branch
      %137 = sbr.rel (0) target = $region33
    $region32: #{_lambda_.1} parent=1 // pred_region
      %139 = dma.done [#allocation3], 16
    $region33: #{_lambda_.1} parent=1 // pred_fallthru
      _
    %140 = vsyncpa [#allocation3], 1

</llo_original>
